<compile_context>
chip_gen: v7x
topology: tpu7x:2x2x1
jax: 0.10.0
libtpu: 0.0.40
codegen_flags: <defaults>
</compile_context>

<pallas_src>
import jax
import jax.numpy as jnp
from jax.experimental import pallas as pl
from jax.experimental.pallas import tpu as pltpu


def _outconv_kernel(x_ref, w_ref, b_ref, o_ref):
    # x_ref: (1, C_in, T)   -- pixel tile, lane-dense
    # w_ref: (C_out, C_in)  -- full weight
    # b_ref: (C_out, 1)     -- full bias (broadcast over lanes)
    # o_ref: (1, C_out, T)
    x = x_ref[0]                                                   # (C_in, T)
    acc = jnp.dot(w_ref[...], x, preferred_element_type=jnp.float32)  # (C_out, T) f32
    acc = acc + b_ref[...].astype(jnp.float32)
    o_ref[0] = acc.astype(o_ref.dtype)


def outconv_pallas(x_nchw, weight, bias, *, hw_tile=2048):
    """1x1 Conv2d forward (PyTorch OutConv semantics).

    x_nchw : (N, C_in, H, W)
    weight : (C_out, C_in, 1, 1)   -- PyTorch Conv2d weight layout
    bias   : (C_out,)
    returns: (N, C_out, H, W)
    """
    N, C_in, H, W = x_nchw.shape
    C_out = weight.shape[0]
    HW = H * W

    # Free views: no HBM transpose passes.
    x3 = x_nchw.reshape(N, C_in, HW)            # (N, C_in, HW)
    w_mat = weight.reshape(C_out, C_in)         # (C_out, C_in)
    b_col = bias.reshape(C_out, 1)              # (C_out, 1)

    # Lane-dense pixel tile: multiple of 128, capped at hw_tile.
    T = min(hw_tile, pl.cdiv(HW, 128) * 128)
    HW_pad = pl.cdiv(HW, T) * T
    if HW_pad != HW:
        x3 = jnp.pad(x3, ((0, 0), (0, 0), (0, HW_pad - HW)))

    grid = (N, HW_pad // T)

    out3 = pl.pallas_call(
        _outconv_kernel,
        out_shape=jax.ShapeDtypeStruct((N, C_out, HW_pad), x_nchw.dtype),
        grid_spec=pltpu.PrefetchScalarGridSpec(
            num_scalar_prefetch=0,
            grid=grid,
            in_specs=[
                pl.BlockSpec((1, C_in, T), lambda n, j: (n, 0, j)),   # pixel tile
                pl.BlockSpec((C_out, C_in), lambda n, j: (0, 0)),     # full weight
                pl.BlockSpec((C_out, 1), lambda n, j: (0, 0)),        # full bias
            ],
            out_specs=pl.BlockSpec((1, C_out, T), lambda n, j: (n, 0, j)),
        ),
        compiler_params=pltpu.CompilerParams(
            dimension_semantics=("parallel", "parallel")),
    )(x3, w_mat, b_col)

    if HW_pad != HW:
        out3 = out3[:, :, :HW]
    return out3.reshape(N, C_out, H, W)


if __name__ == "__main__":
    key = jax.random.PRNGKey(0)
    k_x, k_w, k_b = jax.random.split(key, 3)

    N, C_in, C_out, H, Wd = 2, 4, 3, 16, 16

    x = jax.random.normal(k_x, (N, C_in, H, Wd), dtype=jnp.float32)
    # Deterministic Conv2d-shaped params (kernel_size=1).
    weight = jax.random.normal(k_w, (C_out, C_in, 1, 1), dtype=jnp.float32) * 0.1
    bias = jax.random.normal(k_b, (C_out,), dtype=jnp.float32) * 0.1

    out = outconv_pallas(x, weight, bias)
    out = jax.block_until_ready(out)

    # Reference check in plain JAX (same math as nn.Conv2d with kernel_size=1).
    ref = jnp.einsum("nchw,oc->nohw", x, weight.reshape(C_out, C_in)) \
        + bias.reshape(1, C_out, 1, 1)
    assert out.shape == (N, C_out, H, Wd)
    assert jnp.allclose(out, ref, atol=1e-5, rtol=1e-5)

    print("KERNEL_OK")
</pallas_src>

<mosaic_0001>
module attributes {stable_mosaic.version = 11 : i64} {
  func.func @_outconv_kernel(%arg0: i32, %arg1: i32, %arg2: memref<1x4x256xf32, #tpu.memory_space<vmem>>, %arg3: memref<3x4xf32, #tpu.memory_space<vmem>>, %arg4: memref<3x1xf32, #tpu.memory_space<vmem>>, %arg5: memref<1x3x256xf32, #tpu.memory_space<vmem>>) attributes {dimension_semantics = [#tpu.dimension_semantics<parallel>, #tpu.dimension_semantics<parallel>], iteration_bounds = array<i64: 2, 1>, scalar_prefetch = 0 : i64, scratch_operands = 0 : i64, tpu.core_type = #tpu.core_type<tc>, window_params = [{transform_indices = @transform_0, window_bounds = array<i64: 1, 4, 256>}, {pipeline_mode = #tpu.pipeline_mode<synchronous>, transform_indices = @transform_1, window_bounds = array<i64: 3, 4>}, {pipeline_mode = #tpu.pipeline_mode<synchronous>, transform_indices = @transform_2, window_bounds = array<i64: 3, 1>}, {transform_indices = @transform_3, window_bounds = array<i64: 1, 3, 256>}]} {
    %c0 = arith.constant 0 : index
    %c0_0 = arith.constant 0 : index
    %c0_1 = arith.constant 0 : index
    %0 = vector.load %arg2[%c0, %c0_0, %c0_1] : memref<1x4x256xf32, #tpu.memory_space<vmem>>, vector<1x4x256xf32>
    %1 = vector.shape_cast %0 : vector<1x4x256xf32> to vector<4x256xf32>
    %c0_2 = arith.constant 0 : index
    %c0_3 = arith.constant 0 : index
    %2 = vector.load %arg3[%c0_2, %c0_3] : memref<3x4xf32, #tpu.memory_space<vmem>>, vector<3x4xf32>
    %cst = arith.constant dense<0.000000e+00> : vector<3x256xf32>
    %3 = tpu.matmul %2, %1, %cst {dimension_numbers = #tpu.dot_dimension_numbers<[1], [0], [0], [1], [0, 0, 1, 1], [], []>} : vector<3x4xf32>, vector<4x256xf32>, vector<3x256xf32> -> vector<3x256xf32>
    %c0_4 = arith.constant 0 : index
    %c0_5 = arith.constant 0 : index
    %4 = vector.load %arg4[%c0_4, %c0_5] : memref<3x1xf32, #tpu.memory_space<vmem>>, vector<3x1xf32>
    %5 = vector.broadcast %4 : vector<3x1xf32> to vector<3x256xf32>
    %6 = arith.addf %3, %5 : vector<3x256xf32>
    %c0_6 = arith.constant 0 : index
    %c0_7 = arith.constant 0 : index
    %c0_8 = arith.constant 0 : index
    %7 = vector.load %arg5[%c0_6, %c0_7, %c0_8] : memref<1x3x256xf32, #tpu.memory_space<vmem>>, vector<1x3x256xf32>
    %8 = vector.shape_cast %7 : vector<1x3x256xf32> to vector<3x256xf32>
    %9 = vector.shape_cast %6 : vector<3x256xf32> to vector<1x3x256xf32>
    tpu.vector_store %arg5[%c0_6, %c0_7, %c0_8], %9 {strides = array<i32>} : memref<1x3x256xf32, #tpu.memory_space<vmem>>, vector<1x3x256xf32>,
    return
  }
  func.func @transform_0(%arg0: i32, %arg1: i32) -> (i32, i32, i32) {
    %c0_i32 = arith.constant 0 : i32
    %c0_i32_0 = arith.constant 0 : i32
    return %arg0, %c0_i32, %arg1 : i32, i32, i32
  }
  func.func @transform_1(%arg0: i32, %arg1: i32) -> (i32, i32) {
    %c0_i32 = arith.constant 0 : i32
    %c0_i32_0 = arith.constant 0 : i32
    %c0_i32_1 = arith.constant 0 : i32
    return %c0_i32, %c0_i32_0 : i32, i32
  }
  func.func @transform_2(%arg0: i32, %arg1: i32) -> (i32, i32) {
    %c0_i32 = arith.constant 0 : i32
    %c0_i32_0 = arith.constant 0 : i32
    %c0_i32_1 = arith.constant 0 : i32
    return %c0_i32, %c0_i32_0 : i32, i32
  }
  func.func @transform_3(%arg0: i32, %arg1: i32) -> (i32, i32, i32) {
    %c0_i32 = arith.constant 0 : i32
    %c0_i32_0 = arith.constant 0 : i32
    return %arg0, %c0_i32, %arg1 : i32, i32, i32
  }
}

</mosaic_0001>

<llo_original>
// kernel: tpu_custom_call.1
$region0: #{tpu_custom_call.1}
  #allocation0 [shape = 'u32[]', space=smem, size = 0x4, offset = 0x4, fixed_abs, tag = 'smem constant byte address 0x4 - core index']
  #allocation1 [shape = 'u32[144,128]{1,0:T(1,128)}', space=vmem, size = 0x12000, scoped, tag = 'internal scratch']
  %s0 = inlined_call_operand.hbm [shape: f32[2,4,256], index: 0, kind: input, shape index: {}]
  %s1 = inlined_call_operand.vmem [shape: f32[3,4], index: 1, kind: input, shape index: {}]
  %s2 = inlined_call_operand.vmem [shape: f32[3,1], index: 2, kind: input, shape index: {}]
  %s3 = inlined_call_operand.vmem [shape: f32[2,3,256], index: 3, kind: output, shape index: {}]
  %s4 = sld [smem:[#allocation0]]
  $region49: #{tpu_custom_call.1} parent=0
    _
  %s6 = ssub.s32 1, %s4
  %s7 = scalar_select 0, %s6, %s4
  $region1: #{tpu_custom_call.1} parent=0
    #allocation2 [shape = 'u8[8192]{0}', space=vmem, size = 0x2000, scoped, tag = 'input window, operand 0']
    #allocation3 [shape = 's32[2]{0}', space=sflag, size = 0x8, scoped, tag = 'scoped memory for tpu_custom_call.1']
    %8 = vsyncpa [#allocation3], 0
    %s9 = scalar_lea.sflag [#allocation3], 1
    %10 = vsyncpa %s9, 0
    loop: start=0, step=1, limit=4
    $region2: #{tpu_custom_call.1} parent=1 // loop_pre_header
      _
    $region3: #{tpu_custom_call.1} parent=1 // loop_header
      %s12 = sphi 0, %s16
      %p13 = scmp.ge.s32.totalorder %s12, 4
      %s19 = sphi 0, %s31
      %s20 = sphi 0, %s27
      %s21 = sphi 0, %s19
      %s22 = sphi 0, %s20
      %s23 = sphi 0, %s21
      %s24 = sphi 0, %s22
      %s36 = sphi 0, %s38
      %s39 = sphi 0, %s36
      %s40 = sphi 0, %s39
      %s56 = sphi 0, %s40
      %s60 = sphi 0, %s60
      %s62 = sphi 0, %s60
      %s63 = sphi 0, %s62
      %s77 = sphi 0, %s63
      %s81 = sphi 0, %s81
      %s83 = sphi 0, %s81
      %s84 = sphi 0, %s83
      %s98 = sphi 0, %s84
      %s106 = sphi 0, %s108
      %s109 = sphi 0, %s106
      %s110 = sphi 0, %s109
      %s126 = sphi 0, %s110
    $region4: #{tpu_custom_call.1} parent=1 // loop_header_branch
      %15 = sbr.rel (%p13) target = $region8
    $region5: #{tpu_custom_call.1} parent=1 // loop_body
      %s17 = ssub.s32 %s12, 1
      %s18 = ssub.s32 %s12, 2
      %s25 = sadd.s32 1, %s20
      %p26 = scmp.ge.s32.totalorder %s25, 1
      %s27 = scalar_select %p26, 0, %s25
      %s28 = sadd.s32 1, %s19
      %s29 = scalar_select %p26, %s28, %s19
      %p30 = scmp.ge.s32.totalorder %s29, 2
      %s31 = scalar_select %p30, 0, %s29
      %s32 = ssub.s32 %s19, %s31
      %s33 = ssub.s32 %s20, %s27
      %s34 = sor.u32 %s32, %s33
      %p35 = scmp.eq.s32.totalorder %s34, 0
      %s37 = sadd.s32 %s36, 1
      %s38 = scalar_select %p35, %s36, %s37
      %p41 = pneg %p35
      %p42 = scmp.eq.s32.totalorder %s12, 1
      %p43 = por %p41, %p42
      %p44 = scmp.ne.s32.totalorder %s36, %s39
      %p45 = scmp.eq.s32.totalorder %s12, 0
      %p46 = por %p44, %p45
      %p47 = scmp.ne.s32.totalorder %s36, %s39
      %p48 = scmp.eq.s32.totalorder %s17, 1
      %p49 = por %p47, %p48
      %p50 = scmp.ne.s32.totalorder %s39, %s40
      %p51 = scmp.eq.s32.totalorder %s17, 0
      %p52 = por %p50, %p51
      %p53 = scmp.ne.s32.totalorder %s39, %s40
      %p54 = scmp.eq.s32.totalorder %s18, 1
      %p55 = por %p53, %p54
      %p57 = scmp.ne.s32.totalorder %s40, %s56
      %p58 = scmp.eq.s32.totalorder %s18, 0
      %p59 = por %p57, %p58
      %s61 = sadd.s32 %s60, 1
      %p64 = scmp.eq.s32.totalorder %s12, 1
      %p65 = scmp.ne.s32.totalorder %s60, %s62
      %p66 = scmp.eq.s32.totalorder %s12, 0
      %p67 = por %p65, %p66
      %p68 = scmp.ne.s32.totalorder %s60, %s62
      %p69 = scmp.eq.s32.totalorder %s17, 1
      %p70 = por %p68, %p69
      %p71 = scmp.ne.s32.totalorder %s62, %s63
      %p72 = scmp.eq.s32.totalorder %s17, 0
      %p73 = por %p71, %p72
      %p74 = scmp.ne.s32.totalorder %s62, %s63
      %p75 = scmp.eq.s32.totalorder %s18, 1
      %p76 = por %p74, %p75
      %p78 = scmp.ne.s32.totalorder %s63, %s77
      %p79 = scmp.eq.s32.totalorder %s18, 0
      %p80 = por %p78, %p79
      %s82 = sadd.s32 %s81, 1
      %p85 = scmp.eq.s32.totalorder %s12, 1
      %p86 = scmp.ne.s32.totalorder %s81, %s83
      %p87 = scmp.eq.s32.totalorder %s12, 0
      %p88 = por %p86, %p87
      %p89 = scmp.ne.s32.totalorder %s81, %s83
      %p90 = scmp.eq.s32.totalorder %s17, 1
      %p91 = por %p89, %p90
      %p92 = scmp.ne.s32.totalorder %s83, %s84
      %p93 = scmp.eq.s32.totalorder %s17, 0
      %p94 = por %p92, %p93
      %p95 = scmp.ne.s32.totalorder %s83, %s84
      %p96 = scmp.eq.s32.totalorder %s18, 1
      %p97 = por %p95, %p96
      %p99 = scmp.ne.s32.totalorder %s84, %s98
      %p100 = scmp.eq.s32.totalorder %s18, 0
      %p101 = por %p99, %p100
      %s102 = ssub.s32 %s19, %s31
      %s103 = ssub.s32 %s20, %s27
      %s104 = sor.u32 %s102, %s103
      %p105 = scmp.eq.s32.totalorder %s104, 0
      %s107 = sadd.s32 %s106, 1
      %s108 = scalar_select %p105, %s106, %s107
      %p111 = pneg %p105
      %p112 = scmp.eq.s32.totalorder %s12, 1
      %p113 = por %p111, %p112
      %p114 = scmp.ne.s32.totalorder %s106, %s109
      %p115 = scmp.eq.s32.totalorder %s12, 0
      %p116 = por %p114, %p115
      %p117 = scmp.ne.s32.totalorder %s106, %s109
      %p118 = scmp.eq.s32.totalorder %s17, 1
      %p119 = por %p117, %p118
      %p120 = scmp.ne.s32.totalorder %s109, %s110
      %p121 = scmp.eq.s32.totalorder %s17, 0
      %p122 = por %p120, %p121
      %p123 = scmp.ne.s32.totalorder %s109, %s110
      %p124 = scmp.eq.s32.totalorder %s18, 1
      %p125 = por %p123, %p124
      %p127 = scmp.ne.s32.totalorder %s110, %s126
      %p128 = scmp.eq.s32.totalorder %s18, 0
      %p129 = por %p127, %p128
      %p130 = scmp.le.s32.totalorder 1, %s12
      %p131 = scmp.lt.s32.totalorder %s12, 3
      %p132 = pnand %p130, %p131
      %p133 = pneg %p132
      // Predicated region
      $region9: #{tpu_custom_call.1} parent=5 // pred_check
        _
      $region10: #{tpu_custom_call.1} parent=5 // pred_check_branch
        %135 = sbr.rel (%p132) target = $region12
      $region11: #{tpu_custom_call.1} parent=5 // pred_region
        %s136 = ssub.s32 %s12, 1
        // Predicated region
        $region13: #{tpu_custom_call.1} parent=11 // pred_check
          %p137 = pneg %p73
        $region14: #{tpu_custom_call.1} parent=11 // pred_check_branch
          %139 = sbr.rel (%p137) target = $region16
        $region15: #{tpu_custom_call.1} parent=11 // pred_region
          _
        $region16: #{tpu_custom_call.1} parent=11 // pred_fallthru
          _
        // Predicated region
        $region17: #{tpu_custom_call.1} parent=11 // pred_check
          %p140 = pneg %p94
        $region18: #{tpu_custom_call.1} parent=11 // pred_check_branch
          %142 = sbr.rel (%p140) target = $region20
        $region19: #{tpu_custom_call.1} parent=11 // pred_region
          _
        $region20: #{tpu_custom_call.1} parent=11 // pred_fallthru
          _
      $region12: #{tpu_custom_call.1} parent=5 // pred_fallthru
        _
      %p143 = scmp.lt.s32.totalorder %s12, 2
      // Predicated region
      $region21: #{tpu_custom_call.1} parent=5 // pred_check
        %p144 = pneg %p143
      $region22: #{tpu_custom_call.1} parent=5 // pred_check_branch
        %146 = sbr.rel (%p144) target = $region24
      $region23: #{tpu_custom_call.1} parent=5 // pred_region
        // Predicated region
        $region25: #{tpu_custom_call.1} parent=23 // pred_check
          %p147 = pneg %p46
        $region26: #{tpu_custom_call.1} parent=23 // pred_check_branch
          %149 = sbr.rel (%p147) target = $region28
        $region27: #{tpu_custom_call.1} parent=23 // pred_region
          %s150 = sand.u32 %s36, 1
          %s151 = scalar_lea.sflag [#allocation3], %s150
          %s152 = sand.u32 %s36, 1
          %s153 = smul.addr %s152, 8
          %s154 = scalar_lea.vmem [#allocation2], %s153
          %s155 = smul.u32 2, %s20
          %s157 = ssub.s32 128, 128
          %158 = vsyncadd %s151, %s157
          %s159 = smul.addr %s19, 2
          %s160 = sadd.s32 %s155, %s159
          %s161 = smul.addr %s160, 64
          %s162 = scalar_lea.hbm %s0, %s161
          %s164 = sshll.u32 %s154, 4
          %s165 = int_to_ptr.vmem [resolvable:$true] %s164
          %167 = dma.hbm_to_vmem [thread:$0]  %s162, 128, %s165, %s151
        $region28: #{tpu_custom_call.1} parent=23 // pred_fallthru
          _
      $region24: #{tpu_custom_call.1} parent=5 // pred_fallthru
        _
      %p168 = scmp.le.s32.totalorder 1, %s12
      %p169 = scmp.lt.s32.totalorder %s12, 3
      %p170 = pnand %p168, %p169
      %p171 = pneg %p170
      // Predicated region
      $region29: #{tpu_custom_call.1} parent=5 // pred_check
        _
      $region30: #{tpu_custom_call.1} parent=5 // pred_check_branch
        %173 = sbr.rel (%p170) target = $region32
      $region31: #{tpu_custom_call.1} parent=5 // pred_region
        %s174 = ssub.s32 %s12, 1
        %s175 = sand.u32 %s39, 1
        %s176 = scalar_lea.sflag [#allocation3], %s175
        %s177 = sand.u32 %s39, 1
        %s178 = smul.addr %s177, 8
        %s179 = scalar_lea.vmem [#allocation2], %s178
        // Predicated region
        $region33: #{tpu_custom_call.1} parent=31 // pred_check
          %p180 = pneg %p52
        $region34: #{tpu_custom_call.1} parent=31 // pred_check_branch
          %182 = sbr.rel (%p180) target = $region36
        $region35: #{tpu_custom_call.1} parent=31 // pred_region
          %183 = dma.done %s176, 128
        $region36: #{tpu_custom_call.1} parent=31 // pred_fallthru
          _
        %s184 = sand.u32 %s39, 1
        %s185 = scalar_lea.sflag [#allocation3], %s184
        %s186 = sand.u32 %s39, 1
        %s187 = smul.addr %s186, 8
        %s188 = scalar_lea.vmem [#allocation2], %s187
        %p189 = pneg %p52
        %p190 = pneg %p49
        %p191 = pneg %p73
        %p192 = pneg %p70
        %p193 = pneg %p94
        %p194 = pneg %p91
        %p195 = pneg %p122
        %p196 = pneg %p119
        %s197 = smul.u32 2, %s22
        %p198 = scmp.lt.s32.totalorder %s21, 1
        %s199 = scalar_select %p198, %s21, 1
        %p200 = scmp.lt.s32.totalorder %s197, 1
        %s201 = scalar_select %p200, %s197, 1
        %s202 = smul.addr %s199, 2
        %s203 = sadd.s32 %s201, %s202
        %s204 = smul.addr %s203, 4
        %s205 = scalar_lea.vmem %s3, %s204
        %s206 = smul.u32 2, %s22
        %s207 = smul.u32 2, %s22
        %p208 = scmp.lt.s32.totalorder %s21, 1
        %s209 = scalar_select %p208, %s21, 1
        %p210 = scmp.lt.s32.totalorder %s207, 1
        %s211 = scalar_select %p210, %s207, 1
        %s212 = smul.addr %s209, 2
        %s213 = sadd.s32 %s211, %s212
        %s214 = smul.addr %s213, 4
        %s215 = scalar_lea.vmem %s3, %s214
        %s216 = smul.u32 2, %s22
        %v217 = vld [vmem:[%s179] sm:$0xff]
        %v218 = vld [vmem:[%s1] sm:$0x7]
        %v219 = vld [vmem:[%s2] sm:$0x7]
        %221 = vset.pattern.permute.xlu0 0
        %222 = vperm.xlu0 %221, %v219
        %v223 = vpop.permute.xlu0 %222
        %v226 = vcombine.high %v217, %v217
        %vm227 = vcmask 31744
        %v229 = vsel %vm227, %v218, 0
        %vm231 = vcmask 1043456
        %v232 = vsel %vm231, %v217, 0
        %v234 = vsel %vm231, %v226, 0
        %236 = vmatprep.subr.mxu0 %v234
        %237 = vmatpush1.msra.mxu0 %v232
        %238 = vmatprep.subr.mxu0 0.0
        %239 = vmatpush1.msra.mxu0 0.0
        %240 = vmatprep.subr.mxu0 0.0
        %241 = vmatpush1.msra.mxu0 0.0
        %242 = vmatprep.subr.mxu0 0.0
        %243 = vmatpush1.msra.mxu0 0.0
        %244 = vmatprep.subr.mxu0 0.0
        %245 = vmatpush1.msra.mxu0 0.0
        %246 = vmatprep.subr.mxu0 0.0
        %247 = vmatpush1.msra.mxu0 0.0
        %248 = vmatprep.subr.mxu0 0.0
        %249 = vmatpush1.msra.mxu0 0.0
        %250 = vmatprep.subr.mxu0 0.0
        %251 = vmatpush1.msra.mxu0 0.0
        %252 = vmatprep.subr.mxu0 0.0
        %253 = vmatpush1.msra.mxu0 0.0
        %254 = vmatprep.subr.mxu0 0.0
        %255 = vmatpush1.msra.mxu0 0.0
        %256 = vmatprep.subr.mxu0 0.0
        %257 = vmatpush1.msra.mxu0 0.0
        %258 = vmatprep.subr.mxu0 0.0
        %259 = vmatpush1.msra.mxu0 0.0
        %260 = vmatprep.subr.mxu0 0.0
        %261 = vmatpush1.msra.mxu0 0.0
        %262 = vmatprep.subr.mxu0 0.0
        %263 = vmatpush1.msra.mxu0 0.0
        %264 = vmatprep.subr.mxu0 0.0
        %265 = vmatpush1.msra.mxu0 0.0
        %266 = vmatprep.subr.mxu0 0.0
        %267 = vmatpush1.msra.mxu0 0.0
        %268 = vmatprep.subr.mxu0 0.0
        %269 = vmatpush1.msra.mxu0 0.0
        %270 = vmatprep.subr.mxu0 0.0
        %271 = vmatpush1.msra.mxu0 0.0
        %272 = vmatprep.subr.mxu0 0.0
        %273 = vmatpush1.msra.mxu0 0.0
        %274 = vmatprep.subr.mxu0 0.0
        %275 = vmatpush1.msra.mxu0 0.0
        %276 = vmatprep.subr.mxu0 0.0
        %277 = vmatpush1.msra.mxu0 0.0
        %278 = vmatprep.subr.mxu0 0.0
        %279 = vmatpush1.msra.mxu0 0.0
        %280 = vmatprep.subr.mxu0 0.0
        %281 = vmatpush1.msra.mxu0 0.0
        %282 = vmatprep.subr.mxu0 0.0
        %283 = vmatpush1.msra.mxu0 0.0
        %284 = vmatprep.subr.mxu0 0.0
        %285 = vmatpush1.msra.mxu0 0.0
        %286 = vmatprep.subr.mxu0 0.0
        %287 = vmatpush1.msra.mxu0 0.0
        %288 = vmatprep.subr.mxu0 0.0
        %289 = vmatpush1.msra.mxu0 0.0
        %290 = vmatprep.subr.mxu0 0.0
        %291 = vmatpush1.msra.mxu0 0.0
        %292 = vmatprep.subr.mxu0 0.0
        %293 = vmatpush1.msra.mxu0 0.0
        %294 = vmatprep.subr.mxu0 0.0
        %295 = vmatpush1.msra.mxu0 0.0
        %296 = vmatprep.subr.mxu0 0.0
        %297 = vmatpush1.msra.mxu0 0.0
        %298 = vmatprep.subr.mxu0 0.0
        %299 = vmatpush1.msra.mxu0 0.0
        %300 = vmatprep.mubr.f32.mxu0 0.0
        %301 = vmatmul.mubr.f32.gmra.mrb[0].mxu0 %v229
        %v302 = vpop.f32.mrb[0].mxu0
        %v303 = vadd.f32 %v223, %v302
        %v304 = vpop.f32.mrb[0].mxu0
        %v305 = vadd.f32 %v223, %v304
        %306 = vdwg.mxu0
        %v309 = vcombine.low %v303, %v305
        %311 = vst [vmem:[%s215] sm:$0x77] %v309
        %s312 = smul.u32 2, %s22
        %p313 = scmp.lt.s32.totalorder %s21, 1
        %s314 = scalar_select %p313, %s21, 1
        %p315 = scmp.lt.s32.totalorder %s312, 1
        %s316 = scalar_select %p315, %s312, 1
        %s317 = smul.addr %s314, 2
        %s318 = sadd.s32 %s316, %s317
        %s319 = smul.addr %s318, 4
        %s320 = scalar_lea.vmem %s3, %s319
        // Predicated region
        $region37: #{tpu_custom_call.1} parent=31 // pred_check
          %p321 = pneg %p119
        $region38: #{tpu_custom_call.1} parent=31 // pred_check_branch
          %323 = sbr.rel (%p321) target = $region40
        $region39: #{tpu_custom_call.1} parent=31 // pred_region
          %s324 = smul.u32 2, %s22
        $region40: #{tpu_custom_call.1} parent=31 // pred_fallthru
          _
      $region32: #{tpu_custom_call.1} parent=5 // pred_fallthru
        _
      %p325 = scmp.le.s32.totalorder 2, %s12
      // Predicated region
      $region41: #{tpu_custom_call.1} parent=5 // pred_check
        %p326 = pneg %p325
      $region42: #{tpu_custom_call.1} parent=5 // pred_check_branch
        %328 = sbr.rel (%p326) target = $region44
      $region43: #{tpu_custom_call.1} parent=5 // pred_region
        %s329 = ssub.s32 %s12, 2
        // Predicated region
        $region45: #{tpu_custom_call.1} parent=43 // pred_check
          %p330 = pneg %p125
        $region46: #{tpu_custom_call.1} parent=43 // pred_check_branch
          %332 = sbr.rel (%p330) target = $region48
        $region47: #{tpu_custom_call.1} parent=43 // pred_region
          %s333 = smul.u32 2, %s24
          %p334 = scmp.lt.s32.totalorder %s23, 1
          %s335 = scalar_select %p334, %s23, 1
          %p336 = scmp.lt.s32.totalorder %s333, 1
          %s337 = scalar_select %p336, %s333, 1
          %s338 = smul.addr %s335, 2
          %s339 = sadd.s32 %s337, %s338
          %s340 = smul.addr %s339, 4
          %s341 = scalar_lea.vmem %s3, %s340
        $region48: #{tpu_custom_call.1} parent=43 // pred_fallthru
          _
      $region44: #{tpu_custom_call.1} parent=5 // pred_fallthru
        _
    $region6: #{tpu_custom_call.1} parent=1 // loop_footer
      %s16 = sadd.s32 1, %s12
    $region7: #{tpu_custom_call.1} parent=1 // loop_footer_branch
      %11 = sbr.rel target = $region3
    $region8: #{tpu_custom_call.1} parent=1 // loop_exit
      _
    %342 = vsyncpa [#allocation3], 1
    %s343 = scalar_lea.sflag [#allocation3], 1
    %344 = vsyncpa %s343, 1

</llo_original>
